<compile_context>
chip_gen: v7x
topology: tpu7x:2x2x1
jax: 0.10.0
libtpu: 0.0.40
codegen_flags: <defaults>
</compile_context>

<pallas_src>
import functools

import jax
import jax.numpy as jnp
import numpy as np
from jax import lax
from jax.experimental import pallas as pl
from jax.experimental.pallas import tpu as pltpu


# ----------------------------------------------------------------------------------
# Kernel
# ----------------------------------------------------------------------------------
def _clamp_kernel(lcoef_ref, lcnst_ref, ucoef_ref, ucnst_ref, dlb_ref, dub_ref,
                  out_lcoef_ref, out_lcnst_ref, out_ucoef_ref, out_ucnst_ref,
                  *, val_min: float, val_max: float):
    lcoef = lcoef_ref[...]                                # (BT, N0, DT)
    ucoef = ucoef_ref[...]                                # (BT, N0, DT)
    lcnst = lcnst_ref[...].astype(jnp.float32)            # (BT, 1, DT)
    ucnst = ucnst_ref[...].astype(jnp.float32)            # (BT, 1, DT)
    dlb = dlb_ref[...]                                     # (BT, 1, N0)
    dub = dub_ref[...]                                     # (BT, 1, N0)

    # Batched matmul: contract the N0 axis of dlb/dub with the N0 axis of coef,
    # batching over BT.  MXU, f32 accumulation.
    dn = (((2,), (1,)), ((0,), (0,)))
    bmm = lambda a, b: lax.dot_general(a, b, dimension_numbers=dn,
                                       preferred_element_type=jnp.float32)

    # --- gamma(): concrete bounds (Ele.lb_of / Ele.ub_of), identity form -----------
    #   lb = dot(dlb, pos(L)) + dot(dub, neg(L)) = dot(dlb, L) + dot(dub - dlb, min(L, 0))
    #   ub = dot(dub, pos(U)) + dot(dlb, neg(U)) = dot(dub, U) + dot(dlb - dub, min(U, 0))
    lbs = bmm(dlb, lcoef) + bmm(dub - dlb, jnp.minimum(lcoef, 0.0)) + lcnst   # (BT,1,DT)
    ubs = bmm(dub, ucoef) + bmm(dlb - dub, jnp.minimum(ucoef, 0.0)) + ucnst   # (BT,1,DT)

    # --- case masks (same definitions as the torch module) -------------------------
    both_le_min = ubs <= val_min
    both_ge_max = lbs >= val_max
    both_valid = (lbs >= val_min) & (ubs <= val_max)
    the_rest = ~(both_le_min | both_ge_max | both_valid)
    lb_min_ub_max = the_rest & (lbs <= val_min) & (ubs <= val_max)
    min_lb_max_ub = the_rest & (lbs >= val_min) & (ubs >= val_max)
    lb_min_max_ub = the_rest & (lbs <= val_min) & (ubs >= val_max)

    denom = ubs - lbs
    denom = jnp.where(denom == 0.0, jnp.ones_like(denom), denom)
    inv_denom = 1.0 / denom
    ub_k = (ubs - val_min) * inv_denom
    ub_b = ubs * (val_min - lbs) * inv_denom
    lb_k = (val_max - lbs) * inv_denom
    lb_b = lbs * (ubs - val_max) * inv_denom

    ones = jnp.ones_like(lbs)
    zeros = jnp.zeros_like(lbs)

    # Per-feature affine maps:  out_coef = coef * K ; out_cnst = cnst * K + Bias.
    # Built with the SAME ordered overwrites as the torch sequential where-chain so
    # boundary-equality priority is preserved (later case wins).
    K_l, B_l = ones, zeros
    K_u, B_u = ones, zeros

    # case: ub <= min  -> pin both to min
    K_l = jnp.where(both_le_min, zeros, K_l); B_l = jnp.where(both_le_min, val_min, B_l)
    K_u = jnp.where(both_le_min, zeros, K_u); B_u = jnp.where(both_le_min, val_min, B_u)

    # case: lb >= max  -> pin both to max
    K_l = jnp.where(both_ge_max, zeros, K_l); B_l = jnp.where(both_ge_max, val_max, B_l)
    K_u = jnp.where(both_ge_max, zeros, K_u); B_u = jnp.where(both_ge_max, val_max, B_u)

    # case: lb <= min < ub <= max  (relax upper line, pin lower to min)
    K_l = jnp.where(lb_min_ub_max, zeros, K_l); B_l = jnp.where(lb_min_ub_max, val_min, B_l)
    K_u = jnp.where(lb_min_ub_max, ub_k, K_u);  B_u = jnp.where(lb_min_ub_max, ub_b, B_u)

    # case: min <= lb < max <= ub  (relax lower line, pin upper to max)
    K_l = jnp.where(min_lb_max_ub, lb_k, K_l);  B_l = jnp.where(min_lb_max_ub, lb_b, B_l)
    K_u = jnp.where(min_lb_max_ub, zeros, K_u); B_u = jnp.where(min_lb_max_ub, val_max, B_u)

    # case: lb <= min and ub >= max  (pin both)
    K_l = jnp.where(lb_min_max_ub, zeros, K_l); B_l = jnp.where(lb_min_max_ub, val_min, B_l)
    K_u = jnp.where(lb_min_max_ub, zeros, K_u); B_u = jnp.where(lb_min_max_ub, val_max, B_u)

    # One broadcast multiply per coefficient element; one store per output.
    out_lcoef_ref[...] = (lcoef * K_l).astype(out_lcoef_ref.dtype)
    out_ucoef_ref[...] = (ucoef * K_u).astype(out_ucoef_ref.dtype)
    out_lcnst_ref[...] = (lcnst * K_l + B_l).astype(out_lcnst_ref.dtype)
    out_ucnst_ref[...] = (ucnst * K_u + B_u).astype(out_ucnst_ref.dtype)


# ----------------------------------------------------------------------------------
# Tiling heuristics
# ----------------------------------------------------------------------------------
_MAX_COEF_BLOCK_BYTES = 2 * 1024 * 1024   # per coef block; 8 double-buffered copies live


def _pick_d_tile(D: int, N0: int, itemsize: int) -> int:
    """Largest lane-dense (multiple-of-128) divisor of D keeping a single-batch
    coefficient slab under budget; full extent if D is not 128-aligned."""
    if D % 128 != 0:
        return D                       # full-extent block (allowed by Pallas)
    max_elems = max(_MAX_COEF_BLOCK_BYTES // max(N0 * itemsize, 1), 128)
    best = 128
    t = 128
    while t <= D:
        if D % t == 0 and t <= max_elems:
            best = t
        t += 128
    return best


def _pick_b_tile(B: int, N0: int, d_tile: int, itemsize: int) -> int:
    """Fuse batch rows per grid step (amortizes per-step overhead, gives the gamma
    dots M = B_TILE), staying under the per-block budget."""
    per_batch = max(N0 * d_tile * itemsize, 1)
    max_b = max(1, _MAX_COEF_BLOCK_BYTES // per_batch)
    best = 1
    for cand in range(1, min(B, max_b) + 1):
        if B % cand == 0:
            best = cand
    return best


def _physical_vmem_bytes() -> int:
    """Trace-time VMEM capacity query with a conservative fallback (v7x = 64 MiB)."""
    try:
        return int(pltpu.get_tpu_info().vmem_capacity_bytes)
    except Exception:
        return 64 * 2 ** 20


# ----------------------------------------------------------------------------------
# Wrapper == Clamp(min, max).forward(Ele(...))
# ----------------------------------------------------------------------------------
def clamp_ele(lcoef, lcnst, ucoef, ucnst, dlb, dub, val_min: float, val_max: float):
    B, N0, D = lcoef.shape
    assert lcnst.shape == (B, 1, D) and ucoef.shape == (B, N0, D)
    assert ucnst.shape == (B, 1, D) and dlb.shape == (B, 1, N0) and dub.shape == (B, 1, N0)

    itemsize = jnp.dtype(lcoef.dtype).itemsize
    d_tile = _pick_d_tile(D, N0, itemsize)
    b_tile = _pick_b_tile(B, N0, d_tile, itemsize)
    grid = (B // b_tile, D // d_tile)   # D innermost -> dlb/dub blocks reused across D

    kernel = functools.partial(_clamp_kernel, val_min=float(val_min), val_max=float(val_max))

    coef_spec = pl.BlockSpec((b_tile, N0, d_tile), lambda b, d: (b, 0, d))
    cnst_spec = pl.BlockSpec((b_tile, 1, d_tile), lambda b, d: (b, 0, d))
    d_spec = pl.BlockSpec((b_tile, 1, N0), lambda b, d: (b, 0, 0))

    out_shape = (
        jax.ShapeDtypeStruct((B, N0, D), lcoef.dtype),
        jax.ShapeDtypeStruct((B, 1, D), lcnst.dtype),
        jax.ShapeDtypeStruct((B, N0, D), ucoef.dtype),
        jax.ShapeDtypeStruct((B, 1, D), ucnst.dtype),
    )

    # Explicit VMEM budget: 4 coef blocks (2 in + 2 out) + 4 cnst blocks + 2 dlb/dub
    # blocks, each double-buffered, plus slack; capped just below physical VMEM so
    # large full-extent blocks (non-128-aligned D) still get enough scoped VMEM.
    coef_block_bytes = b_tile * N0 * d_tile * itemsize
    cnst_block_bytes = b_tile * 1 * d_tile * jnp.dtype(lcnst.dtype).itemsize
    d_block_bytes = b_tile * 1 * N0 * jnp.dtype(dlb.dtype).itemsize
    vmem_need = 2 * (4 * coef_block_bytes + 4 * cnst_block_bytes + 2 * d_block_bytes)
    vmem_cap = _physical_vmem_bytes() - 4 * 2 ** 20        # leave headroom for scratch
    vmem_limit = int(min(vmem_cap, max(32 * 2 ** 20, int(1.5 * vmem_need))))

    new_lcoef, new_lcnst, new_ucoef, new_ucnst = pl.pallas_call(
        kernel,
        out_shape=out_shape,
        grid=grid,
        in_specs=[coef_spec, cnst_spec, coef_spec, cnst_spec, d_spec, d_spec],
        out_specs=(coef_spec, cnst_spec, coef_spec, cnst_spec),
        compiler_params=pltpu.CompilerParams(
            dimension_semantics=("parallel", "parallel"),
            vmem_limit_bytes=vmem_limit),
    )(lcoef, lcnst, ucoef, ucnst, dlb, dub)

    # dlb / dub pass through unchanged, exactly as in the torch module.
    return new_lcoef, new_lcnst, new_ucoef, new_ucnst, dlb, dub


# ----------------------------------------------------------------------------------
# Pure-JAX reference mirroring the PyTorch implementation (for validation)
# ----------------------------------------------------------------------------------
def _clamp_ele_ref(lcoef, lcnst, ucoef, ucnst, dlb, dub, vmin, vmax):
    pos = lambda x: jnp.maximum(x, 0.0)
    neg = lambda x: jnp.minimum(x, 0.0)
    lbs = (jnp.einsum('bif,bfd->bid', dlb, pos(lcoef))
           + jnp.einsum('bif,bfd->bid', dub, neg(lcoef)) + lcnst)
    ubs = (jnp.einsum('bif,bfd->bid', dub, pos(ucoef))
           + jnp.einsum('bif,bfd->bid', dlb, neg(ucoef)) + ucnst)

    coef_zeros = jnp.zeros_like(lcoef)
    cnst_zeros = jnp.zeros_like(lcnst)

    both_le_min = ubs <= vmin
    both_ge_max = lbs >= vmax
    both_valid = (lbs >= vmin) & (ubs <= vmax)
    the_rest = ~(both_le_min | both_ge_max | both_valid)
    lb_min_ub_max = the_rest & (lbs <= vmin) & (ubs <= vmax)
    min_lb_max_ub = the_rest & (lbs >= vmin) & (ubs >= vmax)
    lb_min_max_ub = the_rest & (lbs <= vmin) & (ubs >= vmax)

    flc, fln, fuc, fun = lcoef, lcnst, ucoef, ucnst

    flc = jnp.where(both_le_min, coef_zeros, flc)
    fln = jnp.where(both_le_min, cnst_zeros + vmin, fln)
    fuc = jnp.where(both_le_min, coef_zeros, fuc)
    fun = jnp.where(both_le_min, cnst_zeros + vmin, fun)

    flc = jnp.where(both_ge_max, coef_zeros, flc)
    fln = jnp.where(both_ge_max, cnst_zeros + vmax, fln)
    fuc = jnp.where(both_ge_max, coef_zeros, fuc)
    fun = jnp.where(both_ge_max, cnst_zeros + vmax, fun)

    denom = ubs - lbs
    denom = jnp.where(denom == 0.0, jnp.ones_like(denom), denom)

    ub_k = (ubs - vmin) / denom
    ub_b = ubs * (vmin - lbs) / denom
    flc = jnp.where(lb_min_ub_max, coef_zeros, flc)
    fln = jnp.where(lb_min_ub_max, cnst_zeros + vmin, fln)
    fuc = jnp.where(lb_min_ub_max, ucoef * ub_k, fuc)
    fun = jnp.where(lb_min_ub_max, ucnst * ub_k + ub_b, fun)

    lb_k = (vmax - lbs) / denom
    lb_b = lbs * (ubs - vmax) / denom
    flc = jnp.where(min_lb_max_ub, lcoef * lb_k, flc)
    fln = jnp.where(min_lb_max_ub, lcnst * lb_k + lb_b, fln)
    fuc = jnp.where(min_lb_max_ub, coef_zeros, fuc)
    fun = jnp.where(min_lb_max_ub, cnst_zeros + vmax, fun)

    flc = jnp.where(lb_min_max_ub, coef_zeros, flc)
    fln = jnp.where(lb_min_max_ub, cnst_zeros + vmin, fln)
    fuc = jnp.where(lb_min_max_ub, coef_zeros, fuc)
    fun = jnp.where(lb_min_max_ub, cnst_zeros + vmax, fun)
    return flc, fln, fuc, fun, dlb, dub


# ----------------------------------------------------------------------------------
# Demo / self-test
# ----------------------------------------------------------------------------------
def _make_inputs(key, B, N0, D):
    k1, k2, k3, k4, k5 = jax.random.split(key, 5)
    # Valid abstract element (lcoef/lcnst <= ucoef/ucnst base, dlb <= 0 <= dub) that
    # exercises all case branches.
    lcoef = jax.random.normal(k1, (B, N0, D), jnp.float32) * 0.5
    ucoef = lcoef + jnp.abs(jax.random.normal(k2, (B, N0, D), jnp.float32)) * 0.1
    lcnst = jax.random.normal(k3, (B, 1, D), jnp.float32) * 1.0
    ucnst = lcnst + jnp.abs(jax.random.normal(k4, (B, 1, D), jnp.float32)) * 0.2
    spread = jnp.abs(jax.random.normal(k5, (B, 1, N0), jnp.float32)) * 0.3
    return lcoef, lcnst, ucoef, ucnst, -spread, spread


if __name__ == "__main__":
    VAL_MIN, VAL_MAX = -0.5, 0.5    # Clamp(min=-0.5, max=0.5)
    key = jax.random.PRNGKey(0)
    k_a, k_b, k_c = jax.random.split(key, 3)

    # Case 1: lane-aligned feature dim (D multiple of 128); batch fusion kicks in.
    # Case 2: non-128 feature dim -> full-extent lane block path.
    # Case 3: larger lane-aligned feature dim (multiple lane tiles per block).
    cases = [(k_a, 2, 16, 128), (k_b, 2, 8, 96), (k_c, 2, 16, 256)]

    for kk, B, N0, D in cases:
        inputs = _make_inputs(kk, B, N0, D)
        out = clamp_ele(*inputs, VAL_MIN, VAL_MAX)
        out = jax.block_until_ready(out)
        ref = _clamp_ele_ref(*inputs, VAL_MIN, VAL_MAX)
        for got, want in zip(out, ref):
            np.testing.assert_allclose(np.asarray(got), np.asarray(want),
                                       rtol=1e-5, atol=1e-5)

    print("KERNEL_OK")
</pallas_src>

<mosaic_0001>
module attributes {stable_mosaic.version = 11 : i64} {
  func.func @_clamp_kernel(%arg0: i32, %arg1: i32, %arg2: memref<2x16x128xf32, #tpu.memory_space<vmem>>, %arg3: memref<2x1x128xf32, #tpu.memory_space<vmem>>, %arg4: memref<2x16x128xf32, #tpu.memory_space<vmem>>, %arg5: memref<2x1x128xf32, #tpu.memory_space<vmem>>, %arg6: memref<2x1x16xf32, #tpu.memory_space<vmem>>, %arg7: memref<2x1x16xf32, #tpu.memory_space<vmem>>, %arg8: memref<2x16x128xf32, #tpu.memory_space<vmem>>, %arg9: memref<2x1x128xf32, #tpu.memory_space<vmem>>, %arg10: memref<2x16x128xf32, #tpu.memory_space<vmem>>, %arg11: memref<2x1x128xf32, #tpu.memory_space<vmem>>) attributes {dimension_semantics = [#tpu.dimension_semantics<parallel>, #tpu.dimension_semantics<parallel>], iteration_bounds = array<i64: 1, 1>, scalar_prefetch = 0 : i64, scratch_operands = 0 : i64, tpu.core_type = #tpu.core_type<tc>, window_params = [{transform_indices = @transform_0, window_bounds = array<i64: 2, 16, 128>}, {transform_indices = @transform_1, window_bounds = array<i64: 2, 1, 128>}, {transform_indices = @transform_2, window_bounds = array<i64: 2, 16, 128>}, {transform_indices = @transform_3, window_bounds = array<i64: 2, 1, 128>}, {transform_indices = @transform_4, window_bounds = array<i64: 2, 1, 16>}, {transform_indices = @transform_5, window_bounds = array<i64: 2, 1, 16>}, {transform_indices = @transform_6, window_bounds = array<i64: 2, 16, 128>}, {transform_indices = @transform_7, window_bounds = array<i64: 2, 1, 128>}, {transform_indices = @transform_8, window_bounds = array<i64: 2, 16, 128>}, {transform_indices = @transform_9, window_bounds = array<i64: 2, 1, 128>}]} {
    %c0 = arith.constant 0 : index
    %c0_0 = arith.constant 0 : index
    %c0_1 = arith.constant 0 : index
    %0 = vector.load %arg2[%c0, %c0_0, %c0_1] : memref<2x16x128xf32, #tpu.memory_space<vmem>>, vector<2x16x128xf32>
    %c0_2 = arith.constant 0 : index
    %c0_3 = arith.constant 0 : index
    %c0_4 = arith.constant 0 : index
    %1 = vector.load %arg4[%c0_2, %c0_3, %c0_4] : memref<2x16x128xf32, #tpu.memory_space<vmem>>, vector<2x16x128xf32>
    %c0_5 = arith.constant 0 : index
    %c0_6 = arith.constant 0 : index
    %c0_7 = arith.constant 0 : index
    %2 = vector.load %arg3[%c0_5, %c0_6, %c0_7] : memref<2x1x128xf32, #tpu.memory_space<vmem>>, vector<2x1x128xf32>
    %c0_8 = arith.constant 0 : index
    %c0_9 = arith.constant 0 : index
    %c0_10 = arith.constant 0 : index
    %3 = vector.load %arg5[%c0_8, %c0_9, %c0_10] : memref<2x1x128xf32, #tpu.memory_space<vmem>>, vector<2x1x128xf32>
    %c0_11 = arith.constant 0 : index
    %c0_12 = arith.constant 0 : index
    %c0_13 = arith.constant 0 : index
    %4 = vector.load %arg6[%c0_11, %c0_12, %c0_13] : memref<2x1x16xf32, #tpu.memory_space<vmem>>, vector<2x1x16xf32>
    %c0_14 = arith.constant 0 : index
    %c0_15 = arith.constant 0 : index
    %c0_16 = arith.constant 0 : index
    %5 = vector.load %arg7[%c0_14, %c0_15, %c0_16] : memref<2x1x16xf32, #tpu.memory_space<vmem>>, vector<2x1x16xf32>
    %cst = arith.constant dense<0.000000e+00> : vector<2x1x128xf32>
    %6 = tpu.matmul %4, %0, %cst {dimension_numbers = #tpu.dot_dimension_numbers<[2], [1], [1], [2], [0, 0, 0, 1, 1, 2], [0], [0]>} : vector<2x1x16xf32>, vector<2x16x128xf32>, vector<2x1x128xf32> -> vector<2x1x128xf32>
    %7 = arith.subf %5, %4 : vector<2x1x16xf32>
    %cst_17 = arith.constant 0.000000e+00 : f32
    %8 = vector.broadcast %cst_17 : f32 to vector<2x16x128xf32>
    %9 = arith.minimumf %0, %8 : vector<2x16x128xf32>
    %cst_18 = arith.constant dense<0.000000e+00> : vector<2x1x128xf32>
    %10 = tpu.matmul %7, %9, %cst_18 {dimension_numbers = #tpu.dot_dimension_numbers<[2], [1], [1], [2], [0, 0, 0, 1, 1, 2], [0], [0]>} : vector<2x1x16xf32>, vector<2x16x128xf32>, vector<2x1x128xf32> -> vector<2x1x128xf32>
    %11 = arith.addf %6, %10 : vector<2x1x128xf32>
    %12 = arith.addf %11, %2 : vector<2x1x128xf32>
    %cst_19 = arith.constant dense<0.000000e+00> : vector<2x1x128xf32>
    %13 = tpu.matmul %5, %1, %cst_19 {dimension_numbers = #tpu.dot_dimension_numbers<[2], [1], [1], [2], [0, 0, 0, 1, 1, 2], [0], [0]>} : vector<2x1x16xf32>, vector<2x16x128xf32>, vector<2x1x128xf32> -> vector<2x1x128xf32>
    %14 = arith.subf %4, %5 : vector<2x1x16xf32>
    %cst_20 = arith.constant 0.000000e+00 : f32
    %15 = vector.broadcast %cst_20 : f32 to vector<2x16x128xf32>
    %16 = arith.minimumf %1, %15 : vector<2x16x128xf32>
    %cst_21 = arith.constant dense<0.000000e+00> : vector<2x1x128xf32>
    %17 = tpu.matmul %14, %16, %cst_21 {dimension_numbers = #tpu.dot_dimension_numbers<[2], [1], [1], [2], [0, 0, 0, 1, 1, 2], [0], [0]>} : vector<2x1x16xf32>, vector<2x16x128xf32>, vector<2x1x128xf32> -> vector<2x1x128xf32>
    %18 = arith.addf %13, %17 : vector<2x1x128xf32>
    %19 = arith.addf %18, %3 : vector<2x1x128xf32>
    %cst_22 = arith.constant -5.000000e-01 : f32
    %20 = vector.broadcast %cst_22 : f32 to vector<2x1x128xf32>
    %21 = arith.cmpf ole, %19, %20 : vector<2x1x128xf32>
    %cst_23 = arith.constant 5.000000e-01 : f32
    %22 = vector.broadcast %cst_23 : f32 to vector<2x1x128xf32>
    %23 = arith.cmpf oge, %12, %22 : vector<2x1x128xf32>
    %cst_24 = arith.constant -5.000000e-01 : f32
    %24 = vector.broadcast %cst_24 : f32 to vector<2x1x128xf32>
    %25 = arith.cmpf oge, %12, %24 : vector<2x1x128xf32>
    %cst_25 = arith.constant 5.000000e-01 : f32
    %26 = vector.broadcast %cst_25 : f32 to vector<2x1x128xf32>
    %27 = arith.cmpf ole, %19, %26 : vector<2x1x128xf32>
    %28 = arith.andi %25, %27 : vector<2x1x128xi1>
    %29 = arith.ori %21, %23 : vector<2x1x128xi1>
    %30 = arith.ori %29, %28 : vector<2x1x128xi1>
    %cst_26 = arith.constant dense<true> : vector<2x1x128xi1>
    %31 = arith.xori %30, %cst_26 : vector<2x1x128xi1>
    %cst_27 = arith.constant -5.000000e-01 : f32
    %32 = vector.broadcast %cst_27 : f32 to vector<2x1x128xf32>
    %33 = arith.cmpf ole, %12, %32 : vector<2x1x128xf32>
    %34 = arith.andi %31, %33 : vector<2x1x128xi1>
    %cst_28 = arith.constant 5.000000e-01 : f32
    %35 = vector.broadcast %cst_28 : f32 to vector<2x1x128xf32>
    %36 = arith.cmpf ole, %19, %35 : vector<2x1x128xf32>
    %37 = arith.andi %34, %36 : vector<2x1x128xi1>
    %cst_29 = arith.constant -5.000000e-01 : f32
    %38 = vector.broadcast %cst_29 : f32 to vector<2x1x128xf32>
    %39 = arith.cmpf oge, %12, %38 : vector<2x1x128xf32>
    %40 = arith.andi %31, %39 : vector<2x1x128xi1>
    %cst_30 = arith.constant 5.000000e-01 : f32
    %41 = vector.broadcast %cst_30 : f32 to vector<2x1x128xf32>
    %42 = arith.cmpf oge, %19, %41 : vector<2x1x128xf32>
    %43 = arith.andi %40, %42 : vector<2x1x128xi1>
    %cst_31 = arith.constant -5.000000e-01 : f32
    %44 = vector.broadcast %cst_31 : f32 to vector<2x1x128xf32>
    %45 = arith.cmpf ole, %12, %44 : vector<2x1x128xf32>
    %46 = arith.andi %31, %45 : vector<2x1x128xi1>
    %cst_32 = arith.constant 5.000000e-01 : f32
    %47 = vector.broadcast %cst_32 : f32 to vector<2x1x128xf32>
    %48 = arith.cmpf oge, %19, %47 : vector<2x1x128xf32>
    %49 = arith.andi %46, %48 : vector<2x1x128xi1>
    %50 = arith.subf %19, %12 : vector<2x1x128xf32>
    %cst_33 = arith.constant 0.000000e+00 : f32
    %51 = vector.broadcast %cst_33 : f32 to vector<2x1x128xf32>
    %52 = arith.cmpf oeq, %50, %51 : vector<2x1x128xf32>
    %cst_34 = arith.constant 1.000000e+00 : f32
    %53 = vector.broadcast %cst_34 : f32 to vector<2x1x128xf32>
    %54 = arith.select %52, %53, %50 : vector<2x1x128xi1>, vector<2x1x128xf32>
    %cst_35 = arith.constant 1.000000e+00 : f32
    %55 = vector.broadcast %cst_35 : f32 to vector<2x1x128xf32>
    %56 = arith.divf %55, %54 : vector<2x1x128xf32>
    %cst_36 = arith.constant -5.000000e-01 : f32
    %57 = vector.broadcast %cst_36 : f32 to vector<2x1x128xf32>
    %58 = arith.subf %19, %57 : vector<2x1x128xf32>
    %59 = arith.mulf %58, %56 : vector<2x1x128xf32>
    %cst_37 = arith.constant -5.000000e-01 : f32
    %60 = vector.broadcast %cst_37 : f32 to vector<2x1x128xf32>
    %61 = arith.subf %60, %12 : vector<2x1x128xf32>
    %62 = arith.mulf %19, %61 : vector<2x1x128xf32>
    %63 = arith.mulf %62, %56 : vector<2x1x128xf32>
    %cst_38 = arith.constant 5.000000e-01 : f32
    %64 = vector.broadcast %cst_38 : f32 to vector<2x1x128xf32>
    %65 = arith.subf %64, %12 : vector<2x1x128xf32>
    %66 = arith.mulf %65, %56 : vector<2x1x128xf32>
    %cst_39 = arith.constant 5.000000e-01 : f32
    %67 = vector.broadcast %cst_39 : f32 to vector<2x1x128xf32>
    %68 = arith.subf %19, %67 : vector<2x1x128xf32>
    %69 = arith.mulf %12, %68 : vector<2x1x128xf32>
    %70 = arith.mulf %69, %56 : vector<2x1x128xf32>
    %cst_40 = arith.constant 1.000000e+00 : f32
    %71 = vector.broadcast %cst_40 : f32 to vector<2x1x128xf32>
    %cst_41 = arith.constant 0.000000e+00 : f32
    %72 = vector.broadcast %cst_41 : f32 to vector<2x1x128xf32>
    %73 = arith.select %21, %72, %71 : vector<2x1x128xi1>, vector<2x1x128xf32>
    %cst_42 = arith.constant -5.000000e-01 : f32
    %74 = vector.broadcast %cst_42 : f32 to vector<2x1x128xf32>
    %75 = arith.select %21, %74, %72 : vector<2x1x128xi1>, vector<2x1x128xf32>
    %76 = arith.select %21, %72, %71 : vector<2x1x128xi1>, vector<2x1x128xf32>
    %cst_43 = arith.constant -5.000000e-01 : f32
    %77 = vector.broadcast %cst_43 : f32 to vector<2x1x128xf32>
    %78 = arith.select %21, %77, %72 : vector<2x1x128xi1>, vector<2x1x128xf32>
    %79 = arith.select %23, %72, %73 : vector<2x1x128xi1>, vector<2x1x128xf32>
    %cst_44 = arith.constant 5.000000e-01 : f32
    %80 = vector.broadcast %cst_44 : f32 to vector<2x1x128xf32>
    %81 = arith.select %23, %80, %75 : vector<2x1x128xi1>, vector<2x1x128xf32>
    %82 = arith.select %23, %72, %76 : vector<2x1x128xi1>, vector<2x1x128xf32>
    %cst_45 = arith.constant 5.000000e-01 : f32
    %83 = vector.broadcast %cst_45 : f32 to vector<2x1x128xf32>
    %84 = arith.select %23, %83, %78 : vector<2x1x128xi1>, vector<2x1x128xf32>
    %85 = arith.select %37, %72, %79 : vector<2x1x128xi1>, vector<2x1x128xf32>
    %cst_46 = arith.constant -5.000000e-01 : f32
    %86 = vector.broadcast %cst_46 : f32 to vector<2x1x128xf32>
    %87 = arith.select %37, %86, %81 : vector<2x1x128xi1>, vector<2x1x128xf32>
    %88 = arith.select %37, %59, %82 : vector<2x1x128xi1>, vector<2x1x128xf32>
    %89 = arith.select %37, %63, %84 : vector<2x1x128xi1>, vector<2x1x128xf32>
    %90 = arith.select %43, %66, %85 : vector<2x1x128xi1>, vector<2x1x128xf32>
    %91 = arith.select %43, %70, %87 : vector<2x1x128xi1>, vector<2x1x128xf32>
    %92 = arith.select %43, %72, %88 : vector<2x1x128xi1>, vector<2x1x128xf32>
    %cst_47 = arith.constant 5.000000e-01 : f32
    %93 = vector.broadcast %cst_47 : f32 to vector<2x1x128xf32>
    %94 = arith.select %43, %93, %89 : vector<2x1x128xi1>, vector<2x1x128xf32>
    %95 = arith.select %49, %72, %90 : vector<2x1x128xi1>, vector<2x1x128xf32>
    %cst_48 = arith.constant -5.000000e-01 : f32
    %96 = vector.broadcast %cst_48 : f32 to vector<2x1x128xf32>
    %97 = arith.select %49, %96, %91 : vector<2x1x128xi1>, vector<2x1x128xf32>
    %98 = arith.select %49, %72, %92 : vector<2x1x128xi1>, vector<2x1x128xf32>
    %cst_49 = arith.constant 5.000000e-01 : f32
    %99 = vector.broadcast %cst_49 : f32 to vector<2x1x128xf32>
    %100 = arith.select %49, %99, %94 : vector<2x1x128xi1>, vector<2x1x128xf32>
    %101 = vector.broadcast %95 : vector<2x1x128xf32> to vector<2x16x128xf32>
    %102 = arith.mulf %0, %101 : vector<2x16x128xf32>
    %c0_50 = arith.constant 0 : index
    %c0_51 = arith.constant 0 : index
    %c0_52 = arith.constant 0 : index
    %103 = vector.load %arg8[%c0_50, %c0_51, %c0_52] : memref<2x16x128xf32, #tpu.memory_space<vmem>>, vector<2x16x128xf32>
    tpu.vector_store %arg8[%c0_50, %c0_51, %c0_52], %102 {strides = array<i32>} : memref<2x16x128xf32, #tpu.memory_space<vmem>>, vector<2x16x128xf32>,
    %104 = vector.broadcast %98 : vector<2x1x128xf32> to vector<2x16x128xf32>
    %105 = arith.mulf %1, %104 : vector<2x16x128xf32>
    %c0_53 = arith.constant 0 : index
    %c0_54 = arith.constant 0 : index
    %c0_55 = arith.constant 0 : index
    %106 = vector.load %arg10[%c0_53, %c0_54, %c0_55] : memref<2x16x128xf32, #tpu.memory_space<vmem>>, vector<2x16x128xf32>
    tpu.vector_store %arg10[%c0_53, %c0_54, %c0_55], %105 {strides = array<i32>} : memref<2x16x128xf32, #tpu.memory_space<vmem>>, vector<2x16x128xf32>,
    %107 = arith.mulf %2, %95 : vector<2x1x128xf32>
    %108 = arith.addf %107, %97 : vector<2x1x128xf32>
    %c0_56 = arith.constant 0 : index
    %c0_57 = arith.constant 0 : index
    %c0_58 = arith.constant 0 : index
    %109 = vector.load %arg9[%c0_56, %c0_57, %c0_58] : memref<2x1x128xf32, #tpu.memory_space<vmem>>, vector<2x1x128xf32>
    tpu.vector_store %arg9[%c0_56, %c0_57, %c0_58], %108 {strides = array<i32>} : memref<2x1x128xf32, #tpu.memory_space<vmem>>, vector<2x1x128xf32>,
    %110 = arith.mulf %3, %98 : vector<2x1x128xf32>
    %111 = arith.addf %110, %100 : vector<2x1x128xf32>
    %c0_59 = arith.constant 0 : index
    %c0_60 = arith.constant 0 : index
    %c0_61 = arith.constant 0 : index
    %112 = vector.load %arg11[%c0_59, %c0_60, %c0_61] : memref<2x1x128xf32, #tpu.memory_space<vmem>>, vector<2x1x128xf32>
    tpu.vector_store %arg11[%c0_59, %c0_60, %c0_61], %111 {strides = array<i32>} : memref<2x1x128xf32, #tpu.memory_space<vmem>>, vector<2x1x128xf32>,
    return
  }
  func.func @transform_0(%arg0: i32, %arg1: i32) -> (i32, i32, i32) {
    %c0_i32 = arith.constant 0 : i32
    %c0_i32_0 = arith.constant 0 : i32
    return %arg0, %c0_i32, %arg1 : i32, i32, i32
  }
  func.func @transform_1(%arg0: i32, %arg1: i32) -> (i32, i32, i32) {
    %c0_i32 = arith.constant 0 : i32
    %c0_i32_0 = arith.constant 0 : i32
    return %arg0, %c0_i32, %arg1 : i32, i32, i32
  }
  func.func @transform_2(%arg0: i32, %arg1: i32) -> (i32, i32, i32) {
    %c0_i32 = arith.constant 0 : i32
    %c0_i32_0 = arith.constant 0 : i32
    return %arg0, %c0_i32, %arg1 : i32, i32, i32
  }
  func.func @transform_3(%arg0: i32, %arg1: i32) -> (i32, i32, i32) {
    %c0_i32 = arith.constant 0 : i32
    %c0_i32_0 = arith.constant 0 : i32
    return %arg0, %c0_i32, %arg1 : i32, i32, i32
  }
  func.func @transform_4(%arg0: i32, %arg1: i32) -> (i32, i32, i32) {
    %c0_i32 = arith.constant 0 : i32
    %c0_i32_0 = arith.constant 0 : i32
    %c0_i32_1 = arith.constant 0 : i32
    return %arg0, %c0_i32, %c0_i32_0 : i32, i32, i32
  }
  func.func @transform_5(%arg0: i32, %arg1: i32) -> (i32, i32, i32) {
    %c0_i32 = arith.constant 0 : i32
    %c0_i32_0 = arith.constant 0 : i32
    %c0_i32_1 = arith.constant 0 : i32
    return %arg0, %c0_i32, %c0_i32_0 : i32, i32, i32
  }
  func.func @transform_6(%arg0: i32, %arg1: i32) -> (i32, i32, i32) {
    %c0_i32 = arith.constant 0 : i32
    %c0_i32_0 = arith.constant 0 : i32
    return %arg0, %c0_i32, %arg1 : i32, i32, i32
  }
  func.func @transform_7(%arg0: i32, %arg1: i32) -> (i32, i32, i32) {
    %c0_i32 = arith.constant 0 : i32
    %c0_i32_0 = arith.constant 0 : i32
    return %arg0, %c0_i32, %arg1 : i32, i32, i32
  }
  func.func @transform_8(%arg0: i32, %arg1: i32) -> (i32, i32, i32) {
    %c0_i32 = arith.constant 0 : i32
    %c0_i32_0 = arith.constant 0 : i32
    return %arg0, %c0_i32, %arg1 : i32, i32, i32
  }
  func.func @transform_9(%arg0: i32, %arg1: i32) -> (i32, i32, i32) {
    %c0_i32 = arith.constant 0 : i32
    %c0_i32_0 = arith.constant 0 : i32
    return %arg0, %c0_i32, %arg1 : i32, i32, i32
  }
}

</mosaic_0001>

<llo_original>
// kernel: tpu_custom_call.1
$region0: #{tpu_custom_call.1}
  #allocation0 [shape = 'u32[]', space=smem, size = 0x4, offset = 0x4, fixed_abs, tag = 'smem constant byte address 0x4 - core index']
  #allocation1 [shape = 'u32[144,128]{1,0:T(1,128)}', space=vmem, size = 0x12000, scoped, tag = 'internal scratch']
  %s0 = inlined_call_operand.hbm [shape: f32[2,16,128], index: 0, kind: input, shape index: {}]
  %s1 = inlined_call_operand.vmem [shape: f32[2,1,128], index: 1, kind: input, shape index: {}]
  %s2 = inlined_call_operand.hbm [shape: f32[2,16,128], index: 2, kind: input, shape index: {}]
  %s3 = inlined_call_operand.vmem [shape: f32[2,1,128], index: 3, kind: input, shape index: {}]
  %s4 = inlined_call_operand.vmem [shape: f32[2,1,16], index: 4, kind: input, shape index: {}]
  %s5 = inlined_call_operand.vmem [shape: f32[2,1,16], index: 5, kind: input, shape index: {}]
  %s6 = inlined_call_operand.hbm [shape: f32[2,16,128], index: 6, kind: output, shape index: {0}]
  %s7 = inlined_call_operand.hbm [shape: f32[2,1,128], index: 7, kind: output, shape index: {1}]
  %s8 = inlined_call_operand.hbm [shape: f32[2,16,128], index: 8, kind: output, shape index: {2}]
  %s9 = inlined_call_operand.hbm [shape: f32[2,1,128], index: 9, kind: output, shape index: {3}]
  %10 = xla_tuple %s6, %s7, %s8, %s9
  %s11 = sld [smem:[#allocation0]]
  $region66: #{tpu_custom_call.1} parent=0
    _
  %s13 = ssub.s32 1, %s11
  %s14 = scalar_select 0, %s13, %s11
  $region1: #{tpu_custom_call.1} parent=0
    #allocation2 [shape = 'u8[16384]{0}', space=vmem, size = 0x4000, scoped, tag = 'input window, operand 0, single buffered']
    #allocation3 [shape = 's32[1]{0}', space=sflag, size = 0x4, scoped, tag = 'scoped memory for tpu_custom_call.1']
    #allocation4 [shape = 's32[1]{0}', space=sflag, size = 0x4, scoped, tag = 'scoped memory for tpu_custom_call.1']
    #allocation5 [shape = 'u8[16384]{0}', space=vmem, size = 0x4000, scoped, tag = 'input window, operand 2, single buffered']
    #allocation6 [shape = 's32[1]{0}', space=sflag, size = 0x4, scoped, tag = 'scoped memory for tpu_custom_call.1']
    #allocation7 [shape = 'u8[16384]{0}', space=vmem, size = 0x4000, scoped, tag = 'output window, operand 0, single buffered']
    #allocation8 [shape = 'u8[1024]{0}', space=vmem, size = 0x400, scoped, tag = 'output window, operand 1, single buffered']
    #allocation9 [shape = 's32[1]{0}', space=sflag, size = 0x4, scoped, tag = 'scoped memory for tpu_custom_call.1']
    #allocation10 [shape = 'u8[16384]{0}', space=vmem, size = 0x4000, scoped, tag = 'output window, operand 2, single buffered']
    #allocation11 [shape = 'u8[1024]{0}', space=vmem, size = 0x400, scoped, tag = 'output window, operand 3, single buffered']
    #allocation12 [shape = 's32[1]{0}', space=sflag, size = 0x4, scoped, tag = 'scoped memory for tpu_custom_call.1']
    %15 = vsyncpa [#allocation3], 0
    %16 = vsyncpa [#allocation6], 0
    %17 = vsyncpa [#allocation4], 0
    %18 = vsyncpa [#allocation9], 0
    %19 = vsyncpa [#allocation12], 0
    // Predicated region
    $region2: #{tpu_custom_call.1} parent=1 // pred_check
      _
    $region3: #{tpu_custom_call.1} parent=1 // pred_check_branch
      %21 = sbr.rel (0) target = $region5
    $region4: #{tpu_custom_call.1} parent=1 // pred_region
      %s23 = ssub.s32 512, 512
      %24 = vsyncadd [#allocation3], %s23
      %s25 = sshll.u32 [#allocation2], 4
      %s26 = int_to_ptr.vmem [resolvable:$true] %s25
      %31 = dma.hbm_to_vmem [thread:$0]  %s0, 512, %s26, [#allocation3], 128, 128, 8
    $region5: #{tpu_custom_call.1} parent=1 // pred_fallthru
      _
    // Predicated region
    $region6: #{tpu_custom_call.1} parent=1 // pred_check
      _
    $region7: #{tpu_custom_call.1} parent=1 // pred_check_branch
      %33 = sbr.rel (0) target = $region9
    $region8: #{tpu_custom_call.1} parent=1 // pred_region
      _
    $region9: #{tpu_custom_call.1} parent=1 // pred_fallthru
      _
    // Predicated region
    $region10: #{tpu_custom_call.1} parent=1 // pred_check
      _
    $region11: #{tpu_custom_call.1} parent=1 // pred_check_branch
      %35 = sbr.rel (0) target = $region13
    $region12: #{tpu_custom_call.1} parent=1 // pred_region
      %s37 = ssub.s32 512, 512
      %38 = vsyncadd [#allocation6], %s37
      %s39 = sshll.u32 [#allocation5], 4
      %s40 = int_to_ptr.vmem [resolvable:$true] %s39
      %45 = dma.hbm_to_vmem [thread:$0]  %s2, 512, %s40, [#allocation6], 128, 128, 8
    $region13: #{tpu_custom_call.1} parent=1 // pred_fallthru
      _
    // Predicated region
    $region14: #{tpu_custom_call.1} parent=1 // pred_check
      _
    $region15: #{tpu_custom_call.1} parent=1 // pred_check_branch
      %47 = sbr.rel (0) target = $region17
    $region16: #{tpu_custom_call.1} parent=1 // pred_region
      _
    $region17: #{tpu_custom_call.1} parent=1 // pred_fallthru
      _
    // Predicated region
    $region18: #{tpu_custom_call.1} parent=1 // pred_check
      _
    $region19: #{tpu_custom_call.1} parent=1 // pred_check_branch
      %49 = sbr.rel (0) target = $region21
    $region20: #{tpu_custom_call.1} parent=1 // pred_region
      _
    $region21: #{tpu_custom_call.1} parent=1 // pred_fallthru
      _
    // Predicated region
    $region22: #{tpu_custom_call.1} parent=1 // pred_check
      _
    $region23: #{tpu_custom_call.1} parent=1 // pred_check_branch
      %51 = sbr.rel (0) target = $region25
    $region24: #{tpu_custom_call.1} parent=1 // pred_region
      _
    $region25: #{tpu_custom_call.1} parent=1 // pred_fallthru
      _
    // Predicated region
    $region26: #{tpu_custom_call.1} parent=1 // pred_check
      _
    $region27: #{tpu_custom_call.1} parent=1 // pred_check_branch
      %53 = sbr.rel (0) target = $region29
    $region28: #{tpu_custom_call.1} parent=1 // pred_region
      %54 = dma.done [#allocation3], 512
    $region29: #{tpu_custom_call.1} parent=1 // pred_fallthru
      _
    // Predicated region
    $region30: #{tpu_custom_call.1} parent=1 // pred_check
      _
    $region31: #{tpu_custom_call.1} parent=1 // pred_check_branch
      %56 = sbr.rel (0) target = $region33
    $region32: #{tpu_custom_call.1} parent=1 // pred_region
      %57 = dma.done [#allocation6], 512
    $region33: #{tpu_custom_call.1} parent=1 // pred_fallthru
      _
    %v58 = vld [vmem:[#allocation2] sm:$0xff]
    %v59 = vld [vmem:[#allocation2 + $0x8] sm:$0xff]
    %v60 = vld [vmem:[#allocation2 + $0x10] sm:$0xff]
    %v61 = vld [vmem:[#allocation2 + $0x18] sm:$0xff]
    %v62 = vld [vmem:[#allocation5] sm:$0xff]
    %v63 = vld [vmem:[#allocation5 + $0x8] sm:$0xff]
    %v64 = vld [vmem:[#allocation5 + $0x10] sm:$0xff]
    %v65 = vld [vmem:[#allocation5 + $0x18] sm:$0xff]
    %v66 = vld [vmem:[%s1] sm:$0x1]
    %v67 = vld [vmem:[%s1 + $0x1] sm:$0x1]
    %v68 = vld [vmem:[%s3] sm:$0x1]
    %v69 = vld [vmem:[%s3 + $0x1] sm:$0x1]
    %v70 = vld [vmem:[%s4] sm:$0x1]
    %v71 = vld [vmem:[%s4 + $0x1] sm:$0x1]
    %v72 = vld [vmem:[%s5] sm:$0x1]
    %v73 = vld [vmem:[%s5 + $0x1] sm:$0x1]
    %v74 = vsub.f32 %v72, %v70
    %v75 = vsub.f32 %v73, %v71
    %v76 = vmin.f32 %v58, 0.0
    %v77 = vmin.f32 %v59, 0.0
    %v78 = vmin.f32 %v60, 0.0
    %v79 = vmin.f32 %v61, 0.0
    %vm80 = vcmask 130048
    %v82 = vsel %vm80, %v74, 0
    %84 = vmatprep.subr.mxu0 0.0
    %85 = vmatpush1.msra.mxu0 %v76
    %86 = vmatprep.subr.mxu0 0.0
    %87 = vmatpush1.msra.mxu0 %v77
    %88 = vmatprep.subr.mxu0 0.0
    %89 = vmatpush1.msra.mxu0 0.0
    %90 = vmatprep.subr.mxu0 0.0
    %91 = vmatpush1.msra.mxu0 0.0
    %92 = vmatprep.subr.mxu0 0.0
    %93 = vmatpush1.msra.mxu0 0.0
    %94 = vmatprep.subr.mxu0 0.0
    %95 = vmatpush1.msra.mxu0 0.0
    %96 = vmatprep.subr.mxu0 0.0
    %97 = vmatpush1.msra.mxu0 0.0
    %98 = vmatprep.subr.mxu0 0.0
    %99 = vmatpush1.msra.mxu0 0.0
    %100 = vmatprep.subr.mxu0 0.0
    %101 = vmatpush1.msra.mxu0 0.0
    %102 = vmatprep.subr.mxu0 0.0
    %103 = vmatpush1.msra.mxu0 0.0
    %104 = vmatprep.subr.mxu0 0.0
    %105 = vmatpush1.msra.mxu0 0.0
    %106 = vmatprep.subr.mxu0 0.0
    %107 = vmatpush1.msra.mxu0 0.0
    %108 = vmatprep.subr.mxu0 0.0
    %109 = vmatpush1.msra.mxu0 0.0
    %110 = vmatprep.subr.mxu0 0.0
    %111 = vmatpush1.msra.mxu0 0.0
    %112 = vmatprep.subr.mxu0 0.0
    %113 = vmatpush1.msra.mxu0 0.0
    %114 = vmatprep.subr.mxu0 0.0
    %115 = vmatpush1.msra.mxu0 0.0
    %116 = vmatprep.subr.mxu0 0.0
    %117 = vmatpush1.msra.mxu0 0.0
    %118 = vmatprep.subr.mxu0 0.0
    %119 = vmatpush1.msra.mxu0 0.0
    %120 = vmatprep.subr.mxu0 0.0
    %121 = vmatpush1.msra.mxu0 0.0
    %122 = vmatprep.subr.mxu0 0.0
    %123 = vmatpush1.msra.mxu0 0.0
    %124 = vmatprep.subr.mxu0 0.0
    %125 = vmatpush1.msra.mxu0 0.0
    %126 = vmatprep.subr.mxu0 0.0
    %127 = vmatpush1.msra.mxu0 0.0
    %128 = vmatprep.subr.mxu0 0.0
    %129 = vmatpush1.msra.mxu0 0.0
    %130 = vmatprep.subr.mxu0 0.0
    %131 = vmatpush1.msra.mxu0 0.0
    %132 = vmatprep.subr.mxu0 0.0
    %133 = vmatpush1.msra.mxu0 0.0
    %134 = vmatprep.subr.mxu0 0.0
    %135 = vmatpush1.msra.mxu0 0.0
    %136 = vmatprep.subr.mxu0 0.0
    %137 = vmatpush1.msra.mxu0 0.0
    %138 = vmatprep.subr.mxu0 0.0
    %139 = vmatpush1.msra.mxu0 0.0
    %140 = vmatprep.subr.mxu0 0.0
    %141 = vmatpush1.msra.mxu0 0.0
    %142 = vmatprep.subr.mxu0 0.0
    %143 = vmatpush1.msra.mxu0 0.0
    %144 = vmatprep.subr.mxu0 0.0
    %145 = vmatpush1.msra.mxu0 0.0
    %146 = vmatprep.subr.mxu0 0.0
    %147 = vmatpush1.msra.mxu0 0.0
    %148 = vmatprep.mubr.f32.mxu0 0.0
    %149 = vmatmul.mubr.f32.gmra.mrb[0].mxu0 %v82
    %v150 = vpop.f32.mrb[0].mxu0
    %v151 = vadd.f32 0.0, %v150
    %v152 = vpop.f32.mrb[0].mxu0
    %153 = vdwg.mxu0
    %v155 = vsel %vm80, %v75, 0
    %157 = vmatprep.subr.mxu0 0.0
    %158 = vmatpush1.msra.mxu0 %v78
    %159 = vmatprep.subr.mxu0 0.0
    %160 = vmatpush1.msra.mxu0 %v79
    %161 = vmatprep.subr.mxu0 0.0
    %162 = vmatpush1.msra.mxu0 0.0
    %163 = vmatprep.subr.mxu0 0.0
    %164 = vmatpush1.msra.mxu0 0.0
    %165 = vmatprep.subr.mxu0 0.0
    %166 = vmatpush1.msra.mxu0 0.0
    %167 = vmatprep.subr.mxu0 0.0
    %168 = vmatpush1.msra.mxu0 0.0
    %169 = vmatprep.subr.mxu0 0.0
    %170 = vmatpush1.msra.mxu0 0.0
    %171 = vmatprep.subr.mxu0 0.0
    %172 = vmatpush1.msra.mxu0 0.0
    %173 = vmatprep.subr.mxu0 0.0
    %174 = vmatpush1.msra.mxu0 0.0
    %175 = vmatprep.subr.mxu0 0.0
    %176 = vmatpush1.msra.mxu0 0.0
    %177 = vmatprep.subr.mxu0 0.0
    %178 = vmatpush1.msra.mxu0 0.0
    %179 = vmatprep.subr.mxu0 0.0
    %180 = vmatpush1.msra.mxu0 0.0
    %181 = vmatprep.subr.mxu0 0.0
    %182 = vmatpush1.msra.mxu0 0.0
    %183 = vmatprep.subr.mxu0 0.0
    %184 = vmatpush1.msra.mxu0 0.0
    %185 = vmatprep.subr.mxu0 0.0
    %186 = vmatpush1.msra.mxu0 0.0
    %187 = vmatprep.subr.mxu0 0.0
    %188 = vmatpush1.msra.mxu0 0.0
    %189 = vmatprep.subr.mxu0 0.0
    %190 = vmatpush1.msra.mxu0 0.0
    %191 = vmatprep.subr.mxu0 0.0
    %192 = vmatpush1.msra.mxu0 0.0
    %193 = vmatprep.subr.mxu0 0.0
    %194 = vmatpush1.msra.mxu0 0.0
    %195 = vmatprep.subr.mxu0 0.0
    %196 = vmatpush1.msra.mxu0 0.0
    %197 = vmatprep.subr.mxu0 0.0
    %198 = vmatpush1.msra.mxu0 0.0
    %199 = vmatprep.subr.mxu0 0.0
    %200 = vmatpush1.msra.mxu0 0.0
    %201 = vmatprep.subr.mxu0 0.0
    %202 = vmatpush1.msra.mxu0 0.0
    %203 = vmatprep.subr.mxu0 0.0
    %204 = vmatpush1.msra.mxu0 0.0
    %205 = vmatprep.subr.mxu0 0.0
    %206 = vmatpush1.msra.mxu0 0.0
    %207 = vmatprep.subr.mxu0 0.0
    %208 = vmatpush1.msra.mxu0 0.0
    %209 = vmatprep.subr.mxu0 0.0
    %210 = vmatpush1.msra.mxu0 0.0
    %211 = vmatprep.subr.mxu0 0.0
    %212 = vmatpush1.msra.mxu0 0.0
    %213 = vmatprep.subr.mxu0 0.0
    %214 = vmatpush1.msra.mxu0 0.0
    %215 = vmatprep.subr.mxu0 0.0
    %216 = vmatpush1.msra.mxu0 0.0
    %217 = vmatprep.subr.mxu0 0.0
    %218 = vmatpush1.msra.mxu0 0.0
    %219 = vmatprep.subr.mxu0 0.0
    %220 = vmatpush1.msra.mxu0 0.0
    %221 = vmatprep.mubr.f32.mxu0 0.0
    %222 = vmatmul.mubr.f32.gmra.mrb[0].mxu0 %v155
    %v223 = vpop.f32.mrb[0].mxu0
    %v224 = vadd.f32 0.0, %v223
    %v225 = vpop.f32.mrb[0].mxu0
    %226 = vdwg.mxu0
    %v228 = vsel %vm80, %v70, 0
    %230 = vmatprep.subr.mxu0 0.0
    %231 = vmatpush1.msra.mxu0 %v58
    %232 = vmatprep.subr.mxu0 0.0
    %233 = vmatpush1.msra.mxu0 %v59
    %234 = vmatprep.subr.mxu0 0.0
    %235 = vmatpush1.msra.mxu0 0.0
    %236 = vmatprep.subr.mxu0 0.0
    %237 = vmatpush1.msra.mxu0 0.0
    %238 = vmatprep.subr.mxu0 0.0
    %239 = vmatpush1.msra.mxu0 0.0
    %240 = vmatprep.subr.mxu0 0.0
    %241 = vmatpush1.msra.mxu0 0.0
    %242 = vmatprep.subr.mxu0 0.0
    %243 = vmatpush1.msra.mxu0 0.0
    %244 = vmatprep.subr.mxu0 0.0
    %245 = vmatpush1.msra.mxu0 0.0
    %246 = vmatprep.subr.mxu0 0.0
    %247 = vmatpush1.msra.mxu0 0.0
    %248 = vmatprep.subr.mxu0 0.0
    %249 = vmatpush1.msra.mxu0 0.0
    %250 = vmatprep.subr.mxu0 0.0
    %251 = vmatpush1.msra.mxu0 0.0
    %252 = vmatprep.subr.mxu0 0.0
    %253 = vmatpush1.msra.mxu0 0.0
    %254 = vmatprep.subr.mxu0 0.0
    %255 = vmatpush1.msra.mxu0 0.0
    %256 = vmatprep.subr.mxu0 0.0
    %257 = vmatpush1.msra.mxu0 0.0
    %258 = vmatprep.subr.mxu0 0.0
    %259 = vmatpush1.msra.mxu0 0.0
    %260 = vmatprep.subr.mxu0 0.0
    %261 = vmatpush1.msra.mxu0 0.0
    %262 = vmatprep.subr.mxu0 0.0
    %263 = vmatpush1.msra.mxu0 0.0
    %264 = vmatprep.subr.mxu0 0.0
    %265 = vmatpush1.msra.mxu0 0.0
    %266 = vmatprep.subr.mxu0 0.0
    %267 = vmatpush1.msra.mxu0 0.0
    %268 = vmatprep.subr.mxu0 0.0
    %269 = vmatpush1.msra.mxu0 0.0
    %270 = vmatprep.subr.mxu0 0.0
    %271 = vmatpush1.msra.mxu0 0.0
    %272 = vmatprep.subr.mxu0 0.0
    %273 = vmatpush1.msra.mxu0 0.0
    %274 = vmatprep.subr.mxu0 0.0
    %275 = vmatpush1.msra.mxu0 0.0
    %276 = vmatprep.subr.mxu0 0.0
    %277 = vmatpush1.msra.mxu0 0.0
    %278 = vmatprep.subr.mxu0 0.0
    %279 = vmatpush1.msra.mxu0 0.0
    %280 = vmatprep.subr.mxu0 0.0
    %281 = vmatpush1.msra.mxu0 0.0
    %282 = vmatprep.subr.mxu0 0.0
    %283 = vmatpush1.msra.mxu0 0.0
    %284 = vmatprep.subr.mxu0 0.0
    %285 = vmatpush1.msra.mxu0 0.0
    %286 = vmatprep.subr.mxu0 0.0
    %287 = vmatpush1.msra.mxu0 0.0
    %288 = vmatprep.subr.mxu0 0.0
    %289 = vmatpush1.msra.mxu0 0.0
    %290 = vmatprep.subr.mxu0 0.0
    %291 = vmatpush1.msra.mxu0 0.0
    %292 = vmatprep.subr.mxu0 0.0
    %293 = vmatpush1.msra.mxu0 0.0
    %294 = vmatprep.mubr.f32.mxu0 0.0
    %295 = vmatmul.mubr.f32.gmra.mrb[0].mxu0 %v228
    %v296 = vpop.f32.mrb[0].mxu0
    %v297 = vadd.f32 %v151, %v296
    %v298 = vpop.f32.mrb[0].mxu0
    %299 = vdwg.mxu0
    %v301 = vsel %vm80, %v71, 0
    %303 = vmatprep.subr.mxu0 0.0
    %304 = vmatpush1.msra.mxu0 %v60
    %305 = vmatprep.subr.mxu0 0.0
    %306 = vmatpush1.msra.mxu0 %v61
    %307 = vmatprep.subr.mxu0 0.0
    %308 = vmatpush1.msra.mxu0 0.0
    %309 = vmatprep.subr.mxu0 0.0
    %310 = vmatpush1.msra.mxu0 0.0
    %311 = vmatprep.subr.mxu0 0.0
    %312 = vmatpush1.msra.mxu0 0.0
    %313 = vmatprep.subr.mxu0 0.0
    %314 = vmatpush1.msra.mxu0 0.0
    %315 = vmatprep.subr.mxu0 0.0
    %316 = vmatpush1.msra.mxu0 0.0
    %317 = vmatprep.subr.mxu0 0.0
    %318 = vmatpush1.msra.mxu0 0.0
    %319 = vmatprep.subr.mxu0 0.0
    %320 = vmatpush1.msra.mxu0 0.0
    %321 = vmatprep.subr.mxu0 0.0
    %322 = vmatpush1.msra.mxu0 0.0
    %323 = vmatprep.subr.mxu0 0.0
    %324 = vmatpush1.msra.mxu0 0.0
    %325 = vmatprep.subr.mxu0 0.0
    %326 = vmatpush1.msra.mxu0 0.0
    %327 = vmatprep.subr.mxu0 0.0
    %328 = vmatpush1.msra.mxu0 0.0
    %329 = vmatprep.subr.mxu0 0.0
    %330 = vmatpush1.msra.mxu0 0.0
    %331 = vmatprep.subr.mxu0 0.0
    %332 = vmatpush1.msra.mxu0 0.0
    %333 = vmatprep.subr.mxu0 0.0
    %334 = vmatpush1.msra.mxu0 0.0
    %335 = vmatprep.subr.mxu0 0.0
    %336 = vmatpush1.msra.mxu0 0.0
    %337 = vmatprep.subr.mxu0 0.0
    %338 = vmatpush1.msra.mxu0 0.0
    %339 = vmatprep.subr.mxu0 0.0
    %340 = vmatpush1.msra.mxu0 0.0
    %341 = vmatprep.subr.mxu0 0.0
    %342 = vmatpush1.msra.mxu0 0.0
    %343 = vmatprep.subr.mxu0 0.0
    %344 = vmatpush1.msra.mxu0 0.0
    %345 = vmatprep.subr.mxu0 0.0
    %346 = vmatpush1.msra.mxu0 0.0
    %347 = vmatprep.subr.mxu0 0.0
    %348 = vmatpush1.msra.mxu0 0.0
    %349 = vmatprep.subr.mxu0 0.0
    %350 = vmatpush1.msra.mxu0 0.0
    %351 = vmatprep.subr.mxu0 0.0
    %352 = vmatpush1.msra.mxu0 0.0
    %353 = vmatprep.subr.mxu0 0.0
    %354 = vmatpush1.msra.mxu0 0.0
    %355 = vmatprep.subr.mxu0 0.0
    %356 = vmatpush1.msra.mxu0 0.0
    %357 = vmatprep.subr.mxu0 0.0
    %358 = vmatpush1.msra.mxu0 0.0
    %359 = vmatprep.subr.mxu0 0.0
    %360 = vmatpush1.msra.mxu0 0.0
    %361 = vmatprep.subr.mxu0 0.0
    %362 = vmatpush1.msra.mxu0 0.0
    %363 = vmatprep.subr.mxu0 0.0
    %364 = vmatpush1.msra.mxu0 0.0
    %365 = vmatprep.subr.mxu0 0.0
    %366 = vmatpush1.msra.mxu0 0.0
    %367 = vmatprep.mubr.f32.mxu0 0.0
    %368 = vmatmul.mubr.f32.gmra.mrb[0].mxu0 %v301
    %v369 = vpop.f32.mrb[0].mxu0
    %v370 = vadd.f32 %v224, %v369
    %v371 = vpop.f32.mrb[0].mxu0
    %372 = vdwg.mxu0
    %v373 = vadd.f32 %v297, %v66
    %v374 = vadd.f32 %v370, %v67
    %v375 = vsub.f32 %v70, %v72
    %v376 = vsub.f32 %v71, %v73
    %v377 = vmin.f32 %v62, 0.0
    %v378 = vmin.f32 %v63, 0.0
    %v379 = vmin.f32 %v64, 0.0
    %v380 = vmin.f32 %v65, 0.0
    %v382 = vsel %vm80, %v375, 0
    %384 = vmatprep.subr.mxu0 0.0
    %385 = vmatpush1.msra.mxu0 %v377
    %386 = vmatprep.subr.mxu0 0.0
    %387 = vmatpush1.msra.mxu0 %v378
    %388 = vmatprep.subr.mxu0 0.0
    %389 = vmatpush1.msra.mxu0 0.0
    %390 = vmatprep.subr.mxu0 0.0
    %391 = vmatpush1.msra.mxu0 0.0
    %392 = vmatprep.subr.mxu0 0.0
    %393 = vmatpush1.msra.mxu0 0.0
    %394 = vmatprep.subr.mxu0 0.0
    %395 = vmatpush1.msra.mxu0 0.0
    %396 = vmatprep.subr.mxu0 0.0
    %397 = vmatpush1.msra.mxu0 0.0
    %398 = vmatprep.subr.mxu0 0.0
    %399 = vmatpush1.msra.mxu0 0.0
    %400 = vmatprep.subr.mxu0 0.0
    %401 = vmatpush1.msra.mxu0 0.0
    %402 = vmatprep.subr.mxu0 0.0
    %403 = vmatpush1.msra.mxu0 0.0
    %404 = vmatprep.subr.mxu0 0.0
    %405 = vmatpush1.msra.mxu0 0.0
    %406 = vmatprep.subr.mxu0 0.0
    %407 = vmatpush1.msra.mxu0 0.0
    %408 = vmatprep.subr.mxu0 0.0
    %409 = vmatpush1.msra.mxu0 0.0
    %410 = vmatprep.subr.mxu0 0.0
    %411 = vmatpush1.msra.mxu0 0.0
    %412 = vmatprep.subr.mxu0 0.0
    %413 = vmatpush1.msra.mxu0 0.0
    %414 = vmatprep.subr.mxu0 0.0
    %415 = vmatpush1.msra.mxu0 0.0
    %416 = vmatprep.subr.mxu0 0.0
    %417 = vmatpush1.msra.mxu0 0.0
    %418 = vmatprep.subr.mxu0 0.0
    %419 = vmatpush1.msra.mxu0 0.0
    %420 = vmatprep.subr.mxu0 0.0
    %421 = vmatpush1.msra.mxu0 0.0
    %422 = vmatprep.subr.mxu0 0.0
    %423 = vmatpush1.msra.mxu0 0.0
    %424 = vmatprep.subr.mxu0 0.0
    %425 = vmatpush1.msra.mxu0 0.0
    %426 = vmatprep.subr.mxu0 0.0
    %427 = vmatpush1.msra.mxu0 0.0
    %428 = vmatprep.subr.mxu0 0.0
    %429 = vmatpush1.msra.mxu0 0.0
    %430 = vmatprep.subr.mxu0 0.0
    %431 = vmatpush1.msra.mxu0 0.0
    %432 = vmatprep.subr.mxu0 0.0
    %433 = vmatpush1.msra.mxu0 0.0
    %434 = vmatprep.subr.mxu0 0.0
    %435 = vmatpush1.msra.mxu0 0.0
    %436 = vmatprep.subr.mxu0 0.0
    %437 = vmatpush1.msra.mxu0 0.0
    %438 = vmatprep.subr.mxu0 0.0
    %439 = vmatpush1.msra.mxu0 0.0
    %440 = vmatprep.subr.mxu0 0.0
    %441 = vmatpush1.msra.mxu0 0.0
    %442 = vmatprep.subr.mxu0 0.0
    %443 = vmatpush1.msra.mxu0 0.0
    %444 = vmatprep.subr.mxu0 0.0
    %445 = vmatpush1.msra.mxu0 0.0
    %446 = vmatprep.subr.mxu0 0.0
    %447 = vmatpush1.msra.mxu0 0.0
    %448 = vmatprep.mubr.f32.mxu0 0.0
    %449 = vmatmul.mubr.f32.gmra.mrb[0].mxu0 %v382
    %v450 = vpop.f32.mrb[0].mxu0
    %v451 = vadd.f32 0.0, %v450
    %v452 = vpop.f32.mrb[0].mxu0
    %453 = vdwg.mxu0
    %v455 = vsel %vm80, %v376, 0
    %457 = vmatprep.subr.mxu0 0.0
    %458 = vmatpush1.msra.mxu0 %v379
    %459 = vmatprep.subr.mxu0 0.0
    %460 = vmatpush1.msra.mxu0 %v380
    %461 = vmatprep.subr.mxu0 0.0
    %462 = vmatpush1.msra.mxu0 0.0
    %463 = vmatprep.subr.mxu0 0.0
    %464 = vmatpush1.msra.mxu0 0.0
    %465 = vmatprep.subr.mxu0 0.0
    %466 = vmatpush1.msra.mxu0 0.0
    %467 = vmatprep.subr.mxu0 0.0
    %468 = vmatpush1.msra.mxu0 0.0
    %469 = vmatprep.subr.mxu0 0.0
    %470 = vmatpush1.msra.mxu0 0.0
    %471 = vmatprep.subr.mxu0 0.0
    %472 = vmatpush1.msra.mxu0 0.0
    %473 = vmatprep.subr.mxu0 0.0
    %474 = vmatpush1.msra.mxu0 0.0
    %475 = vmatprep.subr.mxu0 0.0
    %476 = vmatpush1.msra.mxu0 0.0
    %477 = vmatprep.subr.mxu0 0.0
    %478 = vmatpush1.msra.mxu0 0.0
    %479 = vmatprep.subr.mxu0 0.0
    %480 = vmatpush1.msra.mxu0 0.0
    %481 = vmatprep.subr.mxu0 0.0
    %482 = vmatpush1.msra.mxu0 0.0
    %483 = vmatprep.subr.mxu0 0.0
    %484 = vmatpush1.msra.mxu0 0.0
    %485 = vmatprep.subr.mxu0 0.0
    %486 = vmatpush1.msra.mxu0 0.0
    %487 = vmatprep.subr.mxu0 0.0
    %488 = vmatpush1.msra.mxu0 0.0
    %489 = vmatprep.subr.mxu0 0.0
    %490 = vmatpush1.msra.mxu0 0.0
    %491 = vmatprep.subr.mxu0 0.0
    %492 = vmatpush1.msra.mxu0 0.0
    %493 = vmatprep.subr.mxu0 0.0
    %494 = vmatpush1.msra.mxu0 0.0
    %495 = vmatprep.subr.mxu0 0.0
    %496 = vmatpush1.msra.mxu0 0.0
    %497 = vmatprep.subr.mxu0 0.0
    %498 = vmatpush1.msra.mxu0 0.0
    %499 = vmatprep.subr.mxu0 0.0
    %500 = vmatpush1.msra.mxu0 0.0
    %501 = vmatprep.subr.mxu0 0.0
    %502 = vmatpush1.msra.mxu0 0.0
    %503 = vmatprep.subr.mxu0 0.0
    %504 = vmatpush1.msra.mxu0 0.0
    %505 = vmatprep.subr.mxu0 0.0
    %506 = vmatpush1.msra.mxu0 0.0
    %507 = vmatprep.subr.mxu0 0.0
    %508 = vmatpush1.msra.mxu0 0.0
    %509 = vmatprep.subr.mxu0 0.0
    %510 = vmatpush1.msra.mxu0 0.0
    %511 = vmatprep.subr.mxu0 0.0
    %512 = vmatpush1.msra.mxu0 0.0
    %513 = vmatprep.subr.mxu0 0.0
    %514 = vmatpush1.msra.mxu0 0.0
    %515 = vmatprep.subr.mxu0 0.0
    %516 = vmatpush1.msra.mxu0 0.0
    %517 = vmatprep.subr.mxu0 0.0
    %518 = vmatpush1.msra.mxu0 0.0
    %519 = vmatprep.subr.mxu0 0.0
    %520 = vmatpush1.msra.mxu0 0.0
    %521 = vmatprep.mubr.f32.mxu0 0.0
    %522 = vmatmul.mubr.f32.gmra.mrb[0].mxu0 %v455
    %v523 = vpop.f32.mrb[0].mxu0
    %v524 = vadd.f32 0.0, %v523
    %v525 = vpop.f32.mrb[0].mxu0
    %526 = vdwg.mxu0
    %v528 = vsel %vm80, %v72, 0
    %530 = vmatprep.subr.mxu0 0.0
    %531 = vmatpush1.msra.mxu0 %v62
    %532 = vmatprep.subr.mxu0 0.0
    %533 = vmatpush1.msra.mxu0 %v63
    %534 = vmatprep.subr.mxu0 0.0
    %535 = vmatpush1.msra.mxu0 0.0
    %536 = vmatprep.subr.mxu0 0.0
    %537 = vmatpush1.msra.mxu0 0.0
    %538 = vmatprep.subr.mxu0 0.0
    %539 = vmatpush1.msra.mxu0 0.0
    %540 = vmatprep.subr.mxu0 0.0
    %541 = vmatpush1.msra.mxu0 0.0
    %542 = vmatprep.subr.mxu0 0.0
    %543 = vmatpush1.msra.mxu0 0.0
    %544 = vmatprep.subr.mxu0 0.0
    %545 = vmatpush1.msra.mxu0 0.0
    %546 = vmatprep.subr.mxu0 0.0
    %547 = vmatpush1.msra.mxu0 0.0
    %548 = vmatprep.subr.mxu0 0.0
    %549 = vmatpush1.msra.mxu0 0.0
    %550 = vmatprep.subr.mxu0 0.0
    %551 = vmatpush1.msra.mxu0 0.0
    %552 = vmatprep.subr.mxu0 0.0
    %553 = vmatpush1.msra.mxu0 0.0
    %554 = vmatprep.subr.mxu0 0.0
    %555 = vmatpush1.msra.mxu0 0.0
    %556 = vmatprep.subr.mxu0 0.0
    %557 = vmatpush1.msra.mxu0 0.0
    %558 = vmatprep.subr.mxu0 0.0
    %559 = vmatpush1.msra.mxu0 0.0
    %560 = vmatprep.subr.mxu0 0.0
    %561 = vmatpush1.msra.mxu0 0.0
    %562 = vmatprep.subr.mxu0 0.0
    %563 = vmatpush1.msra.mxu0 0.0
    %564 = vmatprep.subr.mxu0 0.0
    %565 = vmatpush1.msra.mxu0 0.0
    %566 = vmatprep.subr.mxu0 0.0
    %567 = vmatpush1.msra.mxu0 0.0
    %568 = vmatprep.subr.mxu0 0.0
    %569 = vmatpush1.msra.mxu0 0.0
    %570 = vmatprep.subr.mxu0 0.0
    %571 = vmatpush1.msra.mxu0 0.0
    %572 = vmatprep.subr.mxu0 0.0
    %573 = vmatpush1.msra.mxu0 0.0
    %574 = vmatprep.subr.mxu0 0.0
    %575 = vmatpush1.msra.mxu0 0.0
    %576 = vmatprep.subr.mxu0 0.0
    %577 = vmatpush1.msra.mxu0 0.0
    %578 = vmatprep.subr.mxu0 0.0
    %579 = vmatpush1.msra.mxu0 0.0
    %580 = vmatprep.subr.mxu0 0.0
    %581 = vmatpush1.msra.mxu0 0.0
    %582 = vmatprep.subr.mxu0 0.0
    %583 = vmatpush1.msra.mxu0 0.0
    %584 = vmatprep.subr.mxu0 0.0
    %585 = vmatpush1.msra.mxu0 0.0
    %586 = vmatprep.subr.mxu0 0.0
    %587 = vmatpush1.msra.mxu0 0.0
    %588 = vmatprep.subr.mxu0 0.0
    %589 = vmatpush1.msra.mxu0 0.0
    %590 = vmatprep.subr.mxu0 0.0
    %591 = vmatpush1.msra.mxu0 0.0
    %592 = vmatprep.subr.mxu0 0.0
    %593 = vmatpush1.msra.mxu0 0.0
    %594 = vmatprep.mubr.f32.mxu0 0.0
    %595 = vmatmul.mubr.f32.gmra.mrb[0].mxu0 %v528
    %v596 = vpop.f32.mrb[0].mxu0
    %v597 = vadd.f32 %v451, %v596
    %v598 = vpop.f32.mrb[0].mxu0
    %599 = vdwg.mxu0
    %v601 = vsel %vm80, %v73, 0
    %603 = vmatprep.subr.mxu0 0.0
    %604 = vmatpush1.msra.mxu0 %v64
    %605 = vmatprep.subr.mxu0 0.0
    %606 = vmatpush1.msra.mxu0 %v65
    %607 = vmatprep.subr.mxu0 0.0
    %608 = vmatpush1.msra.mxu0 0.0
    %609 = vmatprep.subr.mxu0 0.0
    %610 = vmatpush1.msra.mxu0 0.0
    %611 = vmatprep.subr.mxu0 0.0
    %612 = vmatpush1.msra.mxu0 0.0
    %613 = vmatprep.subr.mxu0 0.0
    %614 = vmatpush1.msra.mxu0 0.0
    %615 = vmatprep.subr.mxu0 0.0
    %616 = vmatpush1.msra.mxu0 0.0
    %617 = vmatprep.subr.mxu0 0.0
    %618 = vmatpush1.msra.mxu0 0.0
    %619 = vmatprep.subr.mxu0 0.0
    %620 = vmatpush1.msra.mxu0 0.0
    %621 = vmatprep.subr.mxu0 0.0
    %622 = vmatpush1.msra.mxu0 0.0
    %623 = vmatprep.subr.mxu0 0.0
    %624 = vmatpush1.msra.mxu0 0.0
    %625 = vmatprep.subr.mxu0 0.0
    %626 = vmatpush1.msra.mxu0 0.0
    %627 = vmatprep.subr.mxu0 0.0
    %628 = vmatpush1.msra.mxu0 0.0
    %629 = vmatprep.subr.mxu0 0.0
    %630 = vmatpush1.msra.mxu0 0.0
    %631 = vmatprep.subr.mxu0 0.0
    %632 = vmatpush1.msra.mxu0 0.0
    %633 = vmatprep.subr.mxu0 0.0
    %634 = vmatpush1.msra.mxu0 0.0
    %635 = vmatprep.subr.mxu0 0.0
    %636 = vmatpush1.msra.mxu0 0.0
    %637 = vmatprep.subr.mxu0 0.0
    %638 = vmatpush1.msra.mxu0 0.0
    %639 = vmatprep.subr.mxu0 0.0
    %640 = vmatpush1.msra.mxu0 0.0
    %641 = vmatprep.subr.mxu0 0.0
    %642 = vmatpush1.msra.mxu0 0.0
    %643 = vmatprep.subr.mxu0 0.0
    %644 = vmatpush1.msra.mxu0 0.0
    %645 = vmatprep.subr.mxu0 0.0
    %646 = vmatpush1.msra.mxu0 0.0
    %647 = vmatprep.subr.mxu0 0.0
    %648 = vmatpush1.msra.mxu0 0.0
    %649 = vmatprep.subr.mxu0 0.0
    %650 = vmatpush1.msra.mxu0 0.0
    %651 = vmatprep.subr.mxu0 0.0
    %652 = vmatpush1.msra.mxu0 0.0
    %653 = vmatprep.subr.mxu0 0.0
    %654 = vmatpush1.msra.mxu0 0.0
    %655 = vmatprep.subr.mxu0 0.0
    %656 = vmatpush1.msra.mxu0 0.0
    %657 = vmatprep.subr.mxu0 0.0
    %658 = vmatpush1.msra.mxu0 0.0
    %659 = vmatprep.subr.mxu0 0.0
    %660 = vmatpush1.msra.mxu0 0.0
    %661 = vmatprep.subr.mxu0 0.0
    %662 = vmatpush1.msra.mxu0 0.0
    %663 = vmatprep.subr.mxu0 0.0
    %664 = vmatpush1.msra.mxu0 0.0
    %665 = vmatprep.subr.mxu0 0.0
    %666 = vmatpush1.msra.mxu0 0.0
    %667 = vmatprep.mubr.f32.mxu0 0.0
    %668 = vmatmul.mubr.f32.gmra.mrb[0].mxu0 %v601
    %v669 = vpop.f32.mrb[0].mxu0
    %v670 = vadd.f32 %v524, %v669
    %v671 = vpop.f32.mrb[0].mxu0
    %672 = vdwg.mxu0
    %v673 = vadd.f32 %v597, %v68
    %v674 = vadd.f32 %v670, %v69
    %vm675 = vcmp.le.f32.partialorder %v673, -0.5
    %vm676 = vcmp.le.f32.partialorder %v674, -0.5
    %vm677 = vcmp.ge.f32.partialorder %v373, 0.5
    %vm678 = vcmp.ge.f32.partialorder %v374, 0.5
    %vm679 = vcmp.ge.f32.partialorder %v373, -0.5
    %vm680 = vcmp.ge.f32.partialorder %v374, -0.5
    %vm681 = vcmp.le.f32.partialorder %v673, 0.5
    %vm682 = vcmp.le.f32.partialorder %v674, 0.5
    %vm683 = vmand %vm679, %vm681
    %vm684 = vmand %vm680, %vm682
    %vm685 = vmor %vm675, %vm677
    %vm686 = vmor %vm676, %vm678
    %vm687 = vmor %vm685, %vm683
    %vm688 = vmor %vm686, %vm684
    %vm689 = vmxor %vm687, 1
    %vm690 = vmxor %vm688, 1
    %vm691 = vcmp.le.f32.partialorder %v373, -0.5
    %vm692 = vcmp.le.f32.partialorder %v374, -0.5
    %vm693 = vmand %vm689, %vm691
    %vm694 = vmand %vm690, %vm692
    %vm695 = vmand %vm693, %vm681
    %vm696 = vmand %vm694, %vm682
    %vm697 = vmand %vm689, %vm679
    %vm698 = vmand %vm690, %vm680
    %vm699 = vcmp.ge.f32.partialorder %v673, 0.5
    %vm700 = vcmp.ge.f32.partialorder %v674, 0.5
    %vm701 = vmand %vm697, %vm699
    %vm702 = vmand %vm698, %vm700
    %vm703 = vmand %vm693, %vm699
    %vm704 = vmand %vm694, %vm700
    %v705 = vsub.f32 %v673, %v373
    %v706 = vsub.f32 %v674, %v374
    %vm707 = vcmp.eq.f32.partialorder %v705, 0.0
    %vm708 = vcmp.eq.f32.partialorder %v706, 0.0
    %v709 = vsel %vm707, 1.0, %v705
    %v710 = vsel %vm708, 1.0, %v706
    %v711 = vrcp.pop %v709
    %v712 = vmul.f32 1.0, %v711
    %v713 = vrcp.pop %v710
    %v714 = vmul.f32 1.0, %v713
    %v715 = vsub.f32 %v673, -0.5
    %v716 = vsub.f32 %v674, -0.5
    %v717 = vmul.f32 %v715, %v712
    %v718 = vmul.f32 %v716, %v714
    %v719 = vsub.f32 -0.5, %v373
    %v720 = vsub.f32 -0.5, %v374
    %v721 = vmul.f32 %v673, %v719
    %v722 = vmul.f32 %v674, %v720
    %v723 = vmul.f32 %v721, %v712
    %v724 = vmul.f32 %v722, %v714
    %v725 = vsub.f32 0.5, %v373
    %v726 = vsub.f32 0.5, %v374
    %v727 = vmul.f32 %v725, %v712
    %v728 = vmul.f32 %v726, %v714
    %v729 = vsub.f32 %v673, 0.5
    %v730 = vsub.f32 %v674, 0.5
    %v731 = vmul.f32 %v373, %v729
    %v732 = vmul.f32 %v374, %v730
    %v733 = vmul.f32 %v731, %v712
    %v734 = vmul.f32 %v732, %v714
    %v735 = vsel %vm675, 0.0, 1.0
    %v736 = vsel %vm676, 0.0, 1.0
    %v737 = vsel %vm675, -0.5, 0.0
    %v738 = vsel %vm676, -0.5, 0.0
    %v739 = vsel %vm677, 0.0, %v735
    %v740 = vsel %vm678, 0.0, %v736
    %v741 = vsel %vm677, 0.5, %v737
    %v742 = vsel %vm678, 0.5, %v738
    %v743 = vsel %vm695, 0.0, %v739
    %v744 = vsel %vm696, 0.0, %v740
    %v745 = vsel %vm695, -0.5, %v741
    %v746 = vsel %vm696, -0.5, %v742
    %v747 = vsel %vm695, %v717, %v739
    %v748 = vsel %vm696, %v718, %v740
    %v749 = vsel %vm695, %v723, %v741
    %v750 = vsel %vm696, %v724, %v742
    %v751 = vsel %vm701, %v727, %v743
    %v752 = vsel %vm702, %v728, %v744
    %v753 = vsel %vm701, %v733, %v745
    %v754 = vsel %vm702, %v734, %v746
    %v755 = vsel %vm701, 0.0, %v747
    %v756 = vsel %vm702, 0.0, %v748
    %v757 = vsel %vm701, 0.5, %v749
    %v758 = vsel %vm702, 0.5, %v750
    %v759 = vsel %vm703, 0.0, %v751
    %v760 = vsel %vm704, 0.0, %v752
    %v761 = vsel %vm703, -0.5, %v753
    %v762 = vsel %vm704, -0.5, %v754
    %v763 = vsel %vm703, 0.0, %v755
    %v764 = vsel %vm704, 0.0, %v756
    %v765 = vsel %vm703, 0.5, %v757
    %v766 = vsel %vm704, 0.5, %v758
    %v767 = vlaneseq
    %v768 = vshrl.u32 %v767, 7
    %v769 = vsub.s32 0, %v768
    %v770 = vrot.slane %v759, %v769
    %v771 = vlaneseq
    %v772 = vshrl.u32 %v771, 7
    %v773 = vsub.s32 0, %v772
    %v774 = vrot.slane %v760, %v773
    %v775 = vmul.f32 %v58, %v770
    %v776 = vmul.f32 %v59, %v770
    %v777 = vmul.f32 %v60, %v774
    %v778 = vmul.f32 %v61, %v774
    %779 = vst [vmem:[#allocation7] sm:$0xff] %v775
    %780 = vst [vmem:[#allocation7 + $0x8] sm:$0xff] %v776
    %781 = vst [vmem:[#allocation7 + $0x10] sm:$0xff] %v777
    %782 = vst [vmem:[#allocation7 + $0x18] sm:$0xff] %v778
    %v783 = vlaneseq
    %v784 = vshrl.u32 %v783, 7
    %v785 = vsub.s32 0, %v784
    %v786 = vrot.slane %v763, %v785
    %v787 = vlaneseq
    %v788 = vshrl.u32 %v787, 7
    %v789 = vsub.s32 0, %v788
    %v790 = vrot.slane %v764, %v789
    %v791 = vmul.f32 %v62, %v786
    %v792 = vmul.f32 %v63, %v786
    %v793 = vmul.f32 %v64, %v790
    %v794 = vmul.f32 %v65, %v790
    %795 = vst [vmem:[#allocation10] sm:$0xff] %v791
    %796 = vst [vmem:[#allocation10 + $0x8] sm:$0xff] %v792
    %797 = vst [vmem:[#allocation10 + $0x10] sm:$0xff] %v793
    %798 = vst [vmem:[#allocation10 + $0x18] sm:$0xff] %v794
    %v799 = vmul.f32 %v66, %v759
    %v800 = vmul.f32 %v67, %v760
    %v801 = vadd.f32 %v799, %v761
    %v802 = vadd.f32 %v800, %v762
    %803 = vst [vmem:[#allocation8] sm:$0x1] %v801
    %804 = vst [vmem:[#allocation8 + $0x1] sm:$0x1] %v802
    %v805 = vmul.f32 %v68, %v763
    %v806 = vmul.f32 %v69, %v764
    %v807 = vadd.f32 %v805, %v765
    %v808 = vadd.f32 %v806, %v766
    %809 = vst [vmem:[#allocation11] sm:$0x1] %v807
    %810 = vst [vmem:[#allocation11 + $0x1] sm:$0x1] %v808
    // Predicated region
    $region34: #{tpu_custom_call.1} parent=1 // pred_check
      _
    $region35: #{tpu_custom_call.1} parent=1 // pred_check_branch
      %812 = sbr.rel (0) target = $region37
    $region36: #{tpu_custom_call.1} parent=1 // pred_region
      %s814 = ssub.s32 512, 512
      %815 = vsyncadd [#allocation4], %s814
      %s816 = sshll.u32 [#allocation7], 4
      %s817 = int_to_ptr.vmem [resolvable:$true] %s816
      %822 = dma.vmem_to_hbm [thread:$0]  %s817, 512, %s6, [#allocation4], 128, 128, 8
    $region37: #{tpu_custom_call.1} parent=1 // pred_fallthru
      _
    // Predicated region
    $region38: #{tpu_custom_call.1} parent=1 // pred_check
      _
    $region39: #{tpu_custom_call.1} parent=1 // pred_check_branch
      %824 = sbr.rel (0) target = $region41
    $region40: #{tpu_custom_call.1} parent=1 // pred_region
      %s826 = ssub.s32 32, 32
      %827 = vsyncadd [#allocation9], %s826
      %s828 = sshll.u32 [#allocation8], 4
      %s829 = int_to_ptr.vmem [resolvable:$true] %s828
      %834 = dma.vmem_to_hbm [thread:$0]  %s829, 32, %s7, [#allocation9], 16, 16, 1
    $region41: #{tpu_custom_call.1} parent=1 // pred_fallthru
      _
    // Predicated region
    $region42: #{tpu_custom_call.1} parent=1 // pred_check
      _
    $region43: #{tpu_custom_call.1} parent=1 // pred_check_branch
      %836 = sbr.rel (0) target = $region45
    $region44: #{tpu_custom_call.1} parent=1 // pred_region
      %s838 = ssub.s32 512, 512
      %839 = vsyncadd [#allocation9], %s838
      %s840 = sshll.u32 [#allocation10], 4
      %s841 = int_to_ptr.vmem [resolvable:$true] %s840
      %846 = dma.vmem_to_hbm [thread:$0]  %s841, 512, %s8, [#allocation9], 128, 128, 8
    $region45: #{tpu_custom_call.1} parent=1 // pred_fallthru
      _
    // Predicated region
    $region46: #{tpu_custom_call.1} parent=1 // pred_check
      _
    $region47: #{tpu_custom_call.1} parent=1 // pred_check_branch
      %848 = sbr.rel (0) target = $region49
    $region48: #{tpu_custom_call.1} parent=1 // pred_region
      %s850 = ssub.s32 32, 32
      %851 = vsyncadd [#allocation12], %s850
      %s852 = sshll.u32 [#allocation11], 4
      %s853 = int_to_ptr.vmem [resolvable:$true] %s852
      %858 = dma.vmem_to_hbm [thread:$0]  %s853, 32, %s9, [#allocation12], 16, 16, 1
    $region49: #{tpu_custom_call.1} parent=1 // pred_fallthru
      _
    // Predicated region
    $region50: #{tpu_custom_call.1} parent=1 // pred_check
      _
    $region51: #{tpu_custom_call.1} parent=1 // pred_check_branch
      %860 = sbr.rel (0) target = $region53
    $region52: #{tpu_custom_call.1} parent=1 // pred_region
      %861 = dma.done [#allocation4], 512
    $region53: #{tpu_custom_call.1} parent=1 // pred_fallthru
      _
    // Predicated region
    $region54: #{tpu_custom_call.1} parent=1 // pred_check
      _
    $region55: #{tpu_custom_call.1} parent=1 // pred_check_branch
      %863 = sbr.rel (0) target = $region57
    $region56: #{tpu_custom_call.1} parent=1 // pred_region
      %864 = dma.done [#allocation9], 32
    $region57: #{tpu_custom_call.1} parent=1 // pred_fallthru
      _
    // Predicated region
    $region58: #{tpu_custom_call.1} parent=1 // pred_check
      _
    $region59: #{tpu_custom_call.1} parent=1 // pred_check_branch
      %866 = sbr.rel (0) target = $region61
    $region60: #{tpu_custom_call.1} parent=1 // pred_region
      %867 = dma.done [#allocation9], 512
    $region61: #{tpu_custom_call.1} parent=1 // pred_fallthru
      _
    // Predicated region
    $region62: #{tpu_custom_call.1} parent=1 // pred_check
      _
    $region63: #{tpu_custom_call.1} parent=1 // pred_check_branch
      %869 = sbr.rel (0) target = $region65
    $region64: #{tpu_custom_call.1} parent=1 // pred_region
      %870 = dma.done [#allocation12], 32
    $region65: #{tpu_custom_call.1} parent=1 // pred_fallthru
      _
    %871 = vsyncpa [#allocation3], 1
    %872 = vsyncpa [#allocation6], 1
    %873 = vsyncpa [#allocation4], 1
    %874 = vsyncpa [#allocation9], 1
    %875 = vsyncpa [#allocation12], 1

</llo_original>
